<compile_context>
chip_gen: v5e
topology: v5e:2x2
jax: 0.10.0
libtpu: 0.0.40
codegen_flags: <defaults>
</compile_context>

<pallas_src>
import jax
import jax.numpy as jnp
from jax.experimental import pallas as pl
from jax.experimental.pallas import tpu as pltpu

NUM_CLASSES = 10
LANE = 128  # TPU lane width; hidden/class feature dims are padded to this.


def _round_up(x, m):
    return ((x + m - 1) // m) * m


def _firstnet_kernel(x_ref, w0, b0, w1, b1, w2, b2, out_ref):
    """Forward pass for one [TB, image_size] batch tile.

    x_ref:  [TB, image_size]   original dtype (f32); cast to the weight dtype in-kernel
    wK:     [in_K, 128]        transposed, zero-padded PyTorch Linear weight (bf16)
    bK:     [1, 128]           zero-padded bias (f32)
    out_ref:[TB, 128]          log_softmax over the first NUM_CLASSES lanes (f32);
                               lanes >= NUM_CLASSES hold -inf and are sliced off outside.
    """

    def dense(h, w_ref, b_ref):
        # MXU matmul in the weight dtype, f32 accumulation, f32 bias add.
        return jnp.dot(h.astype(w_ref.dtype), w_ref[...],
                       preferred_element_type=jnp.float32) + b_ref[...]

    h = x_ref[...]                                   # [TB, image_size] f32
    h = jnp.maximum(dense(h, w0, b0), 0.0)           # [TB, 128] f32 (cols >=100 exactly 0)
    h = jnp.maximum(dense(h, w1, b1), 0.0)           # [TB, 128] f32 (cols >= 50 exactly 0)
    logits = dense(h, w2, b2)                        # [TB, 128] f32

    # Mask padded class columns so they don't contribute to the softmax denominator.
    col = jax.lax.broadcasted_iota(jnp.int32, logits.shape, 1)
    logits = jnp.where(col < NUM_CLASSES, logits, -jnp.inf)

    # Numerically stable log_softmax along dim=1, all in f32 on VPU/EUP.
    m = jnp.max(logits, axis=1, keepdims=True)
    shifted = logits - m
    lse = jnp.log(jnp.sum(jnp.exp(shifted), axis=1, keepdims=True))
    out_ref[...] = (shifted - lse).astype(out_ref.dtype)


def prepare_params(params, compute_dtype=jnp.bfloat16):
    """One-time param prep (hoisted out of the forward path).

    Weights arrive as [in, out] (already transposed vs PyTorch); they are cast to the
    compute dtype and zero-padded so every output feature dim (and later-layer input
    dim) is a multiple of 128 lanes. Biases are zero-padded f32 rows.
    """
    flat = []
    for idx, (w, b) in enumerate(params):
        fan_in, fan_out = w.shape
        in_pad = fan_in if idx == 0 else LANE   # layer 0 K = image_size (full-array block)
        out_pad = LANE
        w_p = jnp.zeros((in_pad, out_pad), compute_dtype)
        w_p = w_p.at[:fan_in, :fan_out].set(w.astype(compute_dtype))
        b_p = jnp.zeros((1, out_pad), jnp.float32)
        b_p = b_p.at[0, :fan_out].set(b.astype(jnp.float32))
        flat += [w_p, b_p]
    return tuple(flat)


def firstnet_forward(x, prepared_params, image_size, *, block_batch=1024):
    """x: any shape whose trailing dims flatten to image_size (e.g. [B,1,H,W])."""
    x2d = x.reshape(-1, image_size)              # glue: torch .view(-1, image_size)
    B = x2d.shape[0]

    # MXU-shaped batch tile: multiple of 16 sublanes, large enough to amortize per-step
    # grid overhead, capped at block_batch (sweep 1024/2048/4096 for throughput runs).
    tb = min(block_batch, _round_up(max(B, 1), 16))
    # Prefer >=2 grid steps when the batch allows it (v7x megacore sharding + pipelining).
    if B >= 32 and _round_up(B, tb) // tb < 2:
        tb = _round_up(pl.cdiv(B, 2), 16)
    padded_B = _round_up(B, tb)
    if padded_B != B:
        # Zero rows are independent garbage outputs, sliced off below. No dtype cast here:
        # the bf16 cast happens inside the kernel, halving wrapper-side HBM traffic.
        x2d = jnp.pad(x2d, ((0, padded_B - B), (0, 0)))

    in_specs = [pl.BlockSpec((tb, image_size), lambda i: (i, 0))]   # streamed activations
    for p in prepared_params:
        # Full-array blocks with constant index maps -> DMA'd once, VMEM-resident.
        in_specs.append(pl.BlockSpec(p.shape, lambda i: (0, 0)))

    grid = (padded_B // tb,)

    out = pl.pallas_call(
        _firstnet_kernel,
        out_shape=jax.ShapeDtypeStruct((padded_B, LANE), jnp.float32),
        grid=grid,
        in_specs=in_specs,
        out_specs=pl.BlockSpec((tb, LANE), lambda i: (i, 0)),       # lane-dense store
        compiler_params=pltpu.CompilerParams(
            dimension_semantics=("parallel",),
            vmem_limit_bytes=48 * 1024 * 1024,
        ),
    )(x2d, *prepared_params)

    return out[:B, :NUM_CLASSES]


def init_params(key, image_size):
    """PyTorch Linear default init U(-1/sqrt(fan_in), +1/sqrt(fan_in)); weights [in, out]."""
    dims = [image_size, 100, 50, 10]
    params = []
    for i in range(len(dims) - 1):
        fan_in, fan_out = dims[i], dims[i + 1]
        key, kw, kb = jax.random.split(key, 3)
        bound = 1.0 / jnp.sqrt(fan_in)
        w = jax.random.uniform(kw, (fan_in, fan_out), jnp.float32, -bound, bound)
        b = jax.random.uniform(kb, (fan_out,), jnp.float32, -bound, bound)
        params.append((w, b))
    return params


def reference_forward(x, params, image_size, compute_dtype=jnp.float32):
    """Pure-JAX reference (unpadded params). bf16 compute_dtype mirrors the kernel policy."""
    h = x.reshape(-1, image_size)
    for i, (w, b) in enumerate(params):
        h = jnp.dot(h.astype(compute_dtype), w.astype(compute_dtype),
                    preferred_element_type=jnp.float32) + b.astype(jnp.float32)
        if i < len(params) - 1:
            h = jnp.maximum(h, 0.0)
    m = jnp.max(h, axis=1, keepdims=True)
    return (h - m) - jnp.log(jnp.sum(jnp.exp(h - m), axis=1, keepdims=True))


if __name__ == "__main__":
    H = W = 16
    image_size = H * W          # 256
    batch = 2

    key = jax.random.PRNGKey(0)
    key, kx = jax.random.split(key)
    x = jax.random.normal(kx, (batch, 1, H, W), jnp.float32)   # NCHW-style input

    params = init_params(jax.random.PRNGKey(0), image_size)
    prepared = prepare_params(params)                          # one-time prep

    out = firstnet_forward(x, prepared, image_size)
    out = jax.block_until_ready(out)
    assert out.shape == (batch, NUM_CLASSES)

    # Check against a reference that applies the same bf16 compute policy.
    ref_bf16 = reference_forward(x, params, image_size, compute_dtype=jnp.bfloat16)
    assert jnp.allclose(out, ref_bf16, atol=2e-3, rtol=2e-3), \
        "mismatch vs matched-dtype (bf16) reference"

    # Loose sanity check against the full-f32 reference (bf16 weights drift slightly).
    ref_f32 = reference_forward(x, params, image_size, compute_dtype=jnp.float32)
    assert jnp.allclose(out, ref_f32, atol=1e-1), "mismatch vs f32 reference"

    print("KERNEL_OK")
</pallas_src>

<mosaic_0001>
module attributes {stable_mosaic.version = 11 : i64} {
  func.func @_firstnet_kernel(%arg0: i32, %arg1: memref<16x256xf32, #tpu.memory_space<vmem>>, %arg2: memref<256x128xbf16, #tpu.memory_space<vmem>>, %arg3: memref<1x128xf32, #tpu.memory_space<vmem>>, %arg4: memref<128x128xbf16, #tpu.memory_space<vmem>>, %arg5: memref<1x128xf32, #tpu.memory_space<vmem>>, %arg6: memref<128x128xbf16, #tpu.memory_space<vmem>>, %arg7: memref<1x128xf32, #tpu.memory_space<vmem>>, %arg8: memref<16x128xf32, #tpu.memory_space<vmem>>) attributes {dimension_semantics = [#tpu.dimension_semantics<parallel>], iteration_bounds = array<i64: 1>, scalar_prefetch = 0 : i64, scratch_operands = 0 : i64, tpu.core_type = #tpu.core_type<tc>, window_params = [{transform_indices = @transform_0, window_bounds = array<i64: 16, 256>}, {pipeline_mode = #tpu.pipeline_mode<synchronous>, transform_indices = @transform_1, window_bounds = array<i64: 256, 128>}, {pipeline_mode = #tpu.pipeline_mode<synchronous>, transform_indices = @transform_2, window_bounds = array<i64: 1, 128>}, {pipeline_mode = #tpu.pipeline_mode<synchronous>, transform_indices = @transform_3, window_bounds = array<i64: 128, 128>}, {pipeline_mode = #tpu.pipeline_mode<synchronous>, transform_indices = @transform_4, window_bounds = array<i64: 1, 128>}, {pipeline_mode = #tpu.pipeline_mode<synchronous>, transform_indices = @transform_5, window_bounds = array<i64: 128, 128>}, {pipeline_mode = #tpu.pipeline_mode<synchronous>, transform_indices = @transform_6, window_bounds = array<i64: 1, 128>}, {transform_indices = @transform_7, window_bounds = array<i64: 16, 128>}]} {
    %c0 = arith.constant 0 : index
    %c0_0 = arith.constant 0 : index
    %0 = vector.load %arg1[%c0, %c0_0] : memref<16x256xf32, #tpu.memory_space<vmem>>, vector<16x256xf32>
    %1 = arith.truncf %0 : vector<16x256xf32> to vector<16x256xbf16>
    %c0_1 = arith.constant 0 : index
    %c0_2 = arith.constant 0 : index
    %2 = vector.load %arg2[%c0_1, %c0_2] : memref<256x128xbf16, #tpu.memory_space<vmem>>, vector<256x128xbf16>
    %cst = arith.constant dense<0.000000e+00> : vector<16x128xf32>
    %3 = tpu.matmul %1, %2, %cst {dimension_numbers = #tpu.dot_dimension_numbers<[1], [0], [0], [1], [0, 0, 1, 1], [], []>} : vector<16x256xbf16>, vector<256x128xbf16>, vector<16x128xf32> -> vector<16x128xf32>
    %c0_3 = arith.constant 0 : index
    %c0_4 = arith.constant 0 : index
    %4 = vector.load %arg3[%c0_3, %c0_4] : memref<1x128xf32, #tpu.memory_space<vmem>>, vector<1x128xf32>
    %5 = vector.broadcast %4 : vector<1x128xf32> to vector<16x128xf32>
    %6 = arith.addf %3, %5 : vector<16x128xf32>
    %cst_5 = arith.constant 0.000000e+00 : f32
    %7 = vector.broadcast %cst_5 : f32 to vector<16x128xf32>
    %8 = arith.maximumf %6, %7 : vector<16x128xf32>
    %9 = arith.truncf %8 : vector<16x128xf32> to vector<16x128xbf16>
    %c0_6 = arith.constant 0 : index
    %c0_7 = arith.constant 0 : index
    %10 = vector.load %arg4[%c0_6, %c0_7] : memref<128x128xbf16, #tpu.memory_space<vmem>>, vector<128x128xbf16>
    %cst_8 = arith.constant dense<0.000000e+00> : vector<16x128xf32>
    %11 = tpu.matmul %9, %10, %cst_8 {dimension_numbers = #tpu.dot_dimension_numbers<[1], [0], [0], [1], [0, 0, 1, 1], [], []>} : vector<16x128xbf16>, vector<128x128xbf16>, vector<16x128xf32> -> vector<16x128xf32>
    %c0_9 = arith.constant 0 : index
    %c0_10 = arith.constant 0 : index
    %12 = vector.load %arg5[%c0_9, %c0_10] : memref<1x128xf32, #tpu.memory_space<vmem>>, vector<1x128xf32>
    %13 = vector.broadcast %12 : vector<1x128xf32> to vector<16x128xf32>
    %14 = arith.addf %11, %13 : vector<16x128xf32>
    %cst_11 = arith.constant 0.000000e+00 : f32
    %15 = vector.broadcast %cst_11 : f32 to vector<16x128xf32>
    %16 = arith.maximumf %14, %15 : vector<16x128xf32>
    %17 = arith.truncf %16 : vector<16x128xf32> to vector<16x128xbf16>
    %c0_12 = arith.constant 0 : index
    %c0_13 = arith.constant 0 : index
    %18 = vector.load %arg6[%c0_12, %c0_13] : memref<128x128xbf16, #tpu.memory_space<vmem>>, vector<128x128xbf16>
    %cst_14 = arith.constant dense<0.000000e+00> : vector<16x128xf32>
    %19 = tpu.matmul %17, %18, %cst_14 {dimension_numbers = #tpu.dot_dimension_numbers<[1], [0], [0], [1], [0, 0, 1, 1], [], []>} : vector<16x128xbf16>, vector<128x128xbf16>, vector<16x128xf32> -> vector<16x128xf32>
    %c0_15 = arith.constant 0 : index
    %c0_16 = arith.constant 0 : index
    %20 = vector.load %arg7[%c0_15, %c0_16] : memref<1x128xf32, #tpu.memory_space<vmem>>, vector<1x128xf32>
    %21 = vector.broadcast %20 : vector<1x128xf32> to vector<16x128xf32>
    %22 = arith.addf %19, %21 : vector<16x128xf32>
    %23 = tpu.iota {dimensions = array<i32: 1>} : vector<16x128xi32>
    %c10_i32 = arith.constant 10 : i32
    %24 = vector.broadcast %c10_i32 : i32 to vector<16x128xi32>
    %25 = arith.cmpi slt, %23, %24 : vector<16x128xi32>
    %cst_17 = arith.constant 0xFF800000 : f32
    %26 = vector.broadcast %cst_17 : f32 to vector<16x128xf32>
    %27 = arith.select %25, %22, %26 : vector<16x128xi1>, vector<16x128xf32>
    %cst_18 = arith.constant dense<0xFF800000> : vector<16xf32>
    %28 = vector.multi_reduction <maximumf>, %27, %cst_18 [1] : vector<16x128xf32> to vector<16xf32>
    %29 = vector.shape_cast %28 : vector<16xf32> to vector<16x1xf32>
    %30 = vector.broadcast %29 : vector<16x1xf32> to vector<16x128xf32>
    %31 = arith.subf %27, %30 : vector<16x128xf32>
    %32 = math.exp %31 : vector<16x128xf32>
    %cst_19 = arith.constant dense<0.000000e+00> : vector<16xf32>
    %33 = vector.multi_reduction <add>, %32, %cst_19 [1] : vector<16x128xf32> to vector<16xf32>
    %34 = vector.shape_cast %33 : vector<16xf32> to vector<16x1xf32>
    %35 = math.log %34 : vector<16x1xf32>
    %36 = vector.broadcast %35 : vector<16x1xf32> to vector<16x128xf32>
    %37 = arith.subf %31, %36 : vector<16x128xf32>
    %c0_20 = arith.constant 0 : index
    %c0_21 = arith.constant 0 : index
    %38 = vector.load %arg8[%c0_20, %c0_21] : memref<16x128xf32, #tpu.memory_space<vmem>>, vector<16x128xf32>
    tpu.vector_store %arg8[%c0_20, %c0_21], %37 {strides = array<i32>} : memref<16x128xf32, #tpu.memory_space<vmem>>, vector<16x128xf32>,
    return
  }
  func.func @transform_0(%arg0: i32) -> (i32, i32) {
    %c0_i32 = arith.constant 0 : i32
    %c0_i32_0 = arith.constant 0 : i32
    return %arg0, %c0_i32 : i32, i32
  }
  func.func @transform_1(%arg0: i32) -> (i32, i32) {
    %c0_i32 = arith.constant 0 : i32
    %c0_i32_0 = arith.constant 0 : i32
    %c0_i32_1 = arith.constant 0 : i32
    return %c0_i32, %c0_i32_0 : i32, i32
  }
  func.func @transform_2(%arg0: i32) -> (i32, i32) {
    %c0_i32 = arith.constant 0 : i32
    %c0_i32_0 = arith.constant 0 : i32
    %c0_i32_1 = arith.constant 0 : i32
    return %c0_i32, %c0_i32_0 : i32, i32
  }
  func.func @transform_3(%arg0: i32) -> (i32, i32) {
    %c0_i32 = arith.constant 0 : i32
    %c0_i32_0 = arith.constant 0 : i32
    %c0_i32_1 = arith.constant 0 : i32
    return %c0_i32, %c0_i32_0 : i32, i32
  }
  func.func @transform_4(%arg0: i32) -> (i32, i32) {
    %c0_i32 = arith.constant 0 : i32
    %c0_i32_0 = arith.constant 0 : i32
    %c0_i32_1 = arith.constant 0 : i32
    return %c0_i32, %c0_i32_0 : i32, i32
  }
  func.func @transform_5(%arg0: i32) -> (i32, i32) {
    %c0_i32 = arith.constant 0 : i32
    %c0_i32_0 = arith.constant 0 : i32
    %c0_i32_1 = arith.constant 0 : i32
    return %c0_i32, %c0_i32_0 : i32, i32
  }
  func.func @transform_6(%arg0: i32) -> (i32, i32) {
    %c0_i32 = arith.constant 0 : i32
    %c0_i32_0 = arith.constant 0 : i32
    %c0_i32_1 = arith.constant 0 : i32
    return %c0_i32, %c0_i32_0 : i32, i32
  }
  func.func @transform_7(%arg0: i32) -> (i32, i32) {
    %c0_i32 = arith.constant 0 : i32
    %c0_i32_0 = arith.constant 0 : i32
    return %arg0, %c0_i32 : i32, i32
  }
}

</mosaic_0001>

<llo_original>
// kernel: tpu_custom_call.1
$region0: #{tpu_custom_call.1}
  #allocation0 [shape = 'u32[]', space=smem, size = 0x4, offset = 0x4, fixed_abs, tag = 'smem constant byte address 0x4 - core index']
  #allocation1 [shape = 'u32[72,128]{1,0:T(1,128)}', space=vmem, size = 0x9000, scoped, tag = 'internal scratch']
  %s0 = inlined_call_operand.hbm [shape: f32[16,256], index: 0, kind: input, shape index: {}]
  %s1 = inlined_call_operand.hbm [shape: bf16[256,128], index: 1, kind: input, shape index: {}]
  %s2 = inlined_call_operand.vmem [shape: f32[1,128], index: 2, kind: input, shape index: {}]
  %s3 = inlined_call_operand.hbm [shape: bf16[128,128], index: 3, kind: input, shape index: {}]
  %s4 = inlined_call_operand.vmem [shape: f32[1,128], index: 4, kind: input, shape index: {}]
  %s5 = inlined_call_operand.hbm [shape: bf16[128,128], index: 5, kind: input, shape index: {}]
  %s6 = inlined_call_operand.vmem [shape: f32[1,128], index: 6, kind: input, shape index: {}]
  %s7 = inlined_call_operand.hbm [shape: f32[16,128], index: 7, kind: output, shape index: {}]
  %s8 = sld [smem:[#allocation0]]
  $region54: #{tpu_custom_call.1} parent=0
    _
  %s10 = ssub.s32 1, %s8
  %s11 = scalar_select 0, %s10, %s8
  $region1: #{tpu_custom_call.1} parent=0
    #allocation2 [shape = 'u8[16384]{0}', space=vmem, size = 0x4000, scoped, tag = 'input window, operand 0, single buffered']
    #allocation3 [shape = 's32[1]{0}', space=sflag, size = 0x4, scoped, tag = 'scoped memory for tpu_custom_call.1']
    #allocation4 [shape = 's32[1]{0}', space=sflag, size = 0x4, scoped, tag = 'scoped memory for tpu_custom_call.1']
    #allocation5 [shape = 'u8[65536]{0}', space=vmem, size = 0x10000, scoped, tag = 'input window, operand 1, single buffered']
    #allocation6 [shape = 's32[1]{0}', space=sflag, size = 0x4, scoped, tag = 'scoped memory for tpu_custom_call.1']
    #allocation7 [shape = 'u8[32768]{0}', space=vmem, size = 0x8000, scoped, tag = 'input window, operand 3, single buffered']
    #allocation8 [shape = 'u8[32768]{0}', space=vmem, size = 0x8000, scoped, tag = 'input window, operand 5, single buffered']
    #allocation9 [shape = 's32[1]{0}', space=sflag, size = 0x4, scoped, tag = 'scoped memory for tpu_custom_call.1']
    #allocation10 [shape = 'u8[8192]{0}', space=vmem, size = 0x2000, scoped, tag = 'output window, operand 0, single buffered']
    %12 = vsyncpa [#allocation3], 0
    %13 = vsyncpa [#allocation6], 0
    %14 = vsyncpa [#allocation9], 0
    %15 = vsyncpa [#allocation4], 0
    // Predicated region
    $region2: #{tpu_custom_call.1} parent=1 // pred_check
      _
    $region3: #{tpu_custom_call.1} parent=1 // pred_check_branch
      %17 = sbr.rel (0) target = $region5
    $region4: #{tpu_custom_call.1} parent=1 // pred_region
      %19 = vsyncadd [#allocation3], 0
      %s20 = sshll.u32 %s0, 4
      %s21 = int_to_ptr.hbm [resolvable:$true] %s20
      %s22 = sshll.u32 [#allocation2], 4
      %s23 = int_to_ptr.vmem [resolvable:$true] %s22
      %28 = dma.hbm_to_vmem [thread:$0]  %s21, 512, %s23, [#allocation3], 256, 256, 16
    $region5: #{tpu_custom_call.1} parent=1 // pred_fallthru
      _
    // Predicated region
    $region6: #{tpu_custom_call.1} parent=1 // pred_check
      _
    $region7: #{tpu_custom_call.1} parent=1 // pred_check_branch
      %30 = sbr.rel (0) target = $region9
    $region8: #{tpu_custom_call.1} parent=1 // pred_region
      %32 = vsyncadd [#allocation6], 0
      %s33 = sshll.u32 %s1, 4
      %s34 = int_to_ptr.hbm [resolvable:$true] %s33
      %s35 = sshll.u32 [#allocation5], 4
      %s36 = int_to_ptr.vmem [resolvable:$true] %s35
      %41 = dma.hbm_to_vmem [thread:$0]  %s34, 2048, %s36, [#allocation6], 64, 64, 4
    $region9: #{tpu_custom_call.1} parent=1 // pred_fallthru
      _
    // Predicated region
    $region10: #{tpu_custom_call.1} parent=1 // pred_check
      _
    $region11: #{tpu_custom_call.1} parent=1 // pred_check_branch
      %43 = sbr.rel (0) target = $region13
    $region12: #{tpu_custom_call.1} parent=1 // pred_region
      _
    $region13: #{tpu_custom_call.1} parent=1 // pred_fallthru
      _
    // Predicated region
    $region14: #{tpu_custom_call.1} parent=1 // pred_check
      _
    $region15: #{tpu_custom_call.1} parent=1 // pred_check_branch
      %45 = sbr.rel (0) target = $region17
    $region16: #{tpu_custom_call.1} parent=1 // pred_region
      %47 = vsyncadd [#allocation6], 0
      %s48 = sshll.u32 %s3, 4
      %s49 = int_to_ptr.hbm [resolvable:$true] %s48
      %s50 = sshll.u32 [#allocation7], 4
      %s51 = int_to_ptr.vmem [resolvable:$true] %s50
      %56 = dma.hbm_to_vmem [thread:$0]  %s49, 1024, %s51, [#allocation6], 64, 64, 4
    $region17: #{tpu_custom_call.1} parent=1 // pred_fallthru
      _
    // Predicated region
    $region18: #{tpu_custom_call.1} parent=1 // pred_check
      _
    $region19: #{tpu_custom_call.1} parent=1 // pred_check_branch
      %58 = sbr.rel (0) target = $region21
    $region20: #{tpu_custom_call.1} parent=1 // pred_region
      _
    $region21: #{tpu_custom_call.1} parent=1 // pred_fallthru
      _
    // Predicated region
    $region22: #{tpu_custom_call.1} parent=1 // pred_check
      _
    $region23: #{tpu_custom_call.1} parent=1 // pred_check_branch
      %60 = sbr.rel (0) target = $region25
    $region24: #{tpu_custom_call.1} parent=1 // pred_region
      %62 = vsyncadd [#allocation9], 0
      %s63 = sshll.u32 %s5, 4
      %s64 = int_to_ptr.hbm [resolvable:$true] %s63
      %s65 = sshll.u32 [#allocation8], 4
      %s66 = int_to_ptr.vmem [resolvable:$true] %s65
      %71 = dma.hbm_to_vmem [thread:$0]  %s64, 1024, %s66, [#allocation9], 64, 64, 4
    $region25: #{tpu_custom_call.1} parent=1 // pred_fallthru
      _
    // Predicated region
    $region26: #{tpu_custom_call.1} parent=1 // pred_check
      _
    $region27: #{tpu_custom_call.1} parent=1 // pred_check_branch
      %73 = sbr.rel (0) target = $region29
    $region28: #{tpu_custom_call.1} parent=1 // pred_region
      _
    $region29: #{tpu_custom_call.1} parent=1 // pred_fallthru
      _
    // Predicated region
    $region30: #{tpu_custom_call.1} parent=1 // pred_check
      _
    $region31: #{tpu_custom_call.1} parent=1 // pred_check_branch
      %75 = sbr.rel (0) target = $region33
    $region32: #{tpu_custom_call.1} parent=1 // pred_region
      %77 = dma.done [#allocation3], 512
    $region33: #{tpu_custom_call.1} parent=1 // pred_fallthru
      _
    // Predicated region
    $region34: #{tpu_custom_call.1} parent=1 // pred_check
      _
    $region35: #{tpu_custom_call.1} parent=1 // pred_check_branch
      %79 = sbr.rel (0) target = $region37
    $region36: #{tpu_custom_call.1} parent=1 // pred_region
      %81 = dma.done [#allocation6], 2048
    $region37: #{tpu_custom_call.1} parent=1 // pred_fallthru
      _
    // Predicated region
    $region38: #{tpu_custom_call.1} parent=1 // pred_check
      _
    $region39: #{tpu_custom_call.1} parent=1 // pred_check_branch
      %83 = sbr.rel (0) target = $region41
    $region40: #{tpu_custom_call.1} parent=1 // pred_region
      %85 = dma.done [#allocation6], 1024
    $region41: #{tpu_custom_call.1} parent=1 // pred_fallthru
      _
    // Predicated region
    $region42: #{tpu_custom_call.1} parent=1 // pred_check
      _
    $region43: #{tpu_custom_call.1} parent=1 // pred_check_branch
      %87 = sbr.rel (0) target = $region45
    $region44: #{tpu_custom_call.1} parent=1 // pred_region
      %89 = dma.done [#allocation9], 1024
    $region45: #{tpu_custom_call.1} parent=1 // pred_fallthru
      _
    %v90 = vld [vmem:[#allocation2] sm:$0xff]
    %v91 = vld [vmem:[#allocation2 + $0x8] sm:$0xff]
    %v92 = vld [vmem:[#allocation2 + $0x10] sm:$0xff]
    %v93 = vld [vmem:[#allocation2 + $0x18] sm:$0xff]
    %v94 = vpack.c.bf16 %v92, %v90
    %v95 = vpack.c.bf16 %v93, %v91
    %v96 = vld [vmem:[#allocation5] sm:$0xf]
    %v97 = vld [vmem:[#allocation5 + $0x4] sm:$0xf]
    %v98 = vld [vmem:[#allocation5 + $0x8] sm:$0xf]
    %v99 = vld [vmem:[#allocation5 + $0xc] sm:$0xf]
    %v100 = vld [vmem:[#allocation5 + $0x10] sm:$0xf]
    %v101 = vld [vmem:[#allocation5 + $0x14] sm:$0xf]
    %v102 = vld [vmem:[#allocation5 + $0x18] sm:$0xf]
    %v103 = vld [vmem:[#allocation5 + $0x1c] sm:$0xf]
    %v104 = vld [vmem:[#allocation5 + $0x20] sm:$0xf]
    %v105 = vld [vmem:[#allocation5 + $0x24] sm:$0xf]
    %v106 = vld [vmem:[#allocation5 + $0x28] sm:$0xf]
    %v107 = vld [vmem:[#allocation5 + $0x2c] sm:$0xf]
    %v108 = vld [vmem:[#allocation5 + $0x30] sm:$0xf]
    %v109 = vld [vmem:[#allocation5 + $0x34] sm:$0xf]
    %v110 = vld [vmem:[#allocation5 + $0x38] sm:$0xf]
    %v111 = vld [vmem:[#allocation5 + $0x3c] sm:$0xf]
    %v112 = vld [vmem:[#allocation5 + $0x40] sm:$0xf]
    %v113 = vld [vmem:[#allocation5 + $0x44] sm:$0xf]
    %v114 = vld [vmem:[#allocation5 + $0x48] sm:$0xf]
    %v115 = vld [vmem:[#allocation5 + $0x4c] sm:$0xf]
    %v116 = vld [vmem:[#allocation5 + $0x50] sm:$0xf]
    %v117 = vld [vmem:[#allocation5 + $0x54] sm:$0xf]
    %v118 = vld [vmem:[#allocation5 + $0x58] sm:$0xf]
    %v119 = vld [vmem:[#allocation5 + $0x5c] sm:$0xf]
    %v120 = vld [vmem:[#allocation5 + $0x60] sm:$0xf]
    %v121 = vld [vmem:[#allocation5 + $0x64] sm:$0xf]
    %v122 = vld [vmem:[#allocation5 + $0x68] sm:$0xf]
    %v123 = vld [vmem:[#allocation5 + $0x6c] sm:$0xf]
    %v124 = vld [vmem:[#allocation5 + $0x70] sm:$0xf]
    %v125 = vld [vmem:[#allocation5 + $0x74] sm:$0xf]
    %v126 = vld [vmem:[#allocation5 + $0x78] sm:$0xf]
    %v127 = vld [vmem:[#allocation5 + $0x7c] sm:$0xf]
    %v128 = vld [vmem:[%s2] sm:$0x1]
    %v130 = vperm.slane %v128, 0
    %v164 = vunpack.c.l.b16 %v96
    %v165 = vunpack.c.l.b16 %v97
    %v166 = vunpack.c.l.b16 %v98
    %v167 = vunpack.c.l.b16 %v99
    %v168 = vunpack.c.l.b16 %v100
    %v169 = vunpack.c.l.b16 %v101
    %v170 = vunpack.c.l.b16 %v102
    %v171 = vunpack.c.l.b16 %v103
    %v172 = vunpack.c.l.b16 %v104
    %v173 = vunpack.c.l.b16 %v105
    %v174 = vunpack.c.l.b16 %v106
    %v175 = vunpack.c.l.b16 %v107
    %v176 = vunpack.c.l.b16 %v108
    %v177 = vunpack.c.l.b16 %v109
    %v178 = vunpack.c.l.b16 %v110
    %v179 = vunpack.c.l.b16 %v111
    %v180 = vunpack.c.l.b16 %v112
    %v181 = vunpack.c.l.b16 %v113
    %v182 = vunpack.c.l.b16 %v114
    %v183 = vunpack.c.l.b16 %v115
    %v184 = vunpack.c.l.b16 %v116
    %v185 = vunpack.c.l.b16 %v117
    %v186 = vunpack.c.l.b16 %v118
    %v187 = vunpack.c.l.b16 %v119
    %v188 = vunpack.c.l.b16 %v120
    %v189 = vunpack.c.l.b16 %v121
    %v190 = vunpack.c.l.b16 %v122
    %v191 = vunpack.c.l.b16 %v123
    %v192 = vunpack.c.l.b16 %v124
    %v193 = vunpack.c.l.b16 %v125
    %v194 = vunpack.c.l.b16 %v126
    %v195 = vunpack.c.l.b16 %v127
    %v196 = vpack.c.b16 %v165, %v164
    %v197 = vpack.c.b16 %v167, %v166
    %v198 = vpack.c.b16 %v169, %v168
    %v199 = vpack.c.b16 %v171, %v170
    %v200 = vpack.c.b16 %v173, %v172
    %v201 = vpack.c.b16 %v175, %v174
    %v202 = vpack.c.b16 %v177, %v176
    %v203 = vpack.c.b16 %v179, %v178
    %v204 = vpack.c.b16 %v181, %v180
    %v205 = vpack.c.b16 %v183, %v182
    %v206 = vpack.c.b16 %v185, %v184
    %v207 = vpack.c.b16 %v187, %v186
    %v208 = vpack.c.b16 %v189, %v188
    %v209 = vpack.c.b16 %v191, %v190
    %v210 = vpack.c.b16 %v193, %v192
    %v211 = vpack.c.b16 %v195, %v194
    %228 = vmatpush.bf16.msra.mxu0 %v203
    %229 = vmatpush.bf16.msra.mxu0 %v202
    %230 = vmatpush.bf16.msra.mxu0 %v201
    %231 = vmatpush.bf16.msra.mxu0 %v200
    %232 = vmatpush.bf16.msra.mxu0 %v199
    %233 = vmatpush.bf16.msra.mxu0 %v198
    %234 = vmatpush.bf16.msra.mxu0 %v197
    %235 = vmatpush.bf16.msra.mxu0 %v196
    %236 = vmatmul.bf16.gmra.mxu0 %v94
    %v237 = vpop.f32.mrf.mxu0
    %v238 = vadd.f32 %v130, %v237
    %v239 = vpop.f32.mrf.mxu0
    %v240 = vadd.f32 %v130, %v239
    %241 = vdwg.mxu0
    %242 = vmatpush.bf16.msra.mxu0 %v211
    %243 = vmatpush.bf16.msra.mxu0 %v210
    %244 = vmatpush.bf16.msra.mxu0 %v209
    %245 = vmatpush.bf16.msra.mxu0 %v208
    %246 = vmatpush.bf16.msra.mxu0 %v207
    %247 = vmatpush.bf16.msra.mxu0 %v206
    %248 = vmatpush.bf16.msra.mxu0 %v205
    %249 = vmatpush.bf16.msra.mxu0 %v204
    %250 = vmatmul.bf16.gmra.mxu0 %v95
    %v251 = vpop.f32.mrf.mxu0
    %v252 = vadd.f32 %v238, %v251
    %v253 = vpop.f32.mrf.mxu0
    %v254 = vadd.f32 %v240, %v253
    %255 = vdwg.mxu0
    %v256 = vmax.f32 %v252, 0.0
    %v257 = vmax.f32 %v254, 0.0
    %v258 = vpack.c.bf16 %v257, %v256
    %v259 = vld [vmem:[#allocation7] sm:$0xf]
    %v260 = vld [vmem:[#allocation7 + $0x4] sm:$0xf]
    %v261 = vld [vmem:[#allocation7 + $0x8] sm:$0xf]
    %v262 = vld [vmem:[#allocation7 + $0xc] sm:$0xf]
    %v263 = vld [vmem:[#allocation7 + $0x10] sm:$0xf]
    %v264 = vld [vmem:[#allocation7 + $0x14] sm:$0xf]
    %v265 = vld [vmem:[#allocation7 + $0x18] sm:$0xf]
    %v266 = vld [vmem:[#allocation7 + $0x1c] sm:$0xf]
    %v267 = vld [vmem:[#allocation7 + $0x20] sm:$0xf]
    %v268 = vld [vmem:[#allocation7 + $0x24] sm:$0xf]
    %v269 = vld [vmem:[#allocation7 + $0x28] sm:$0xf]
    %v270 = vld [vmem:[#allocation7 + $0x2c] sm:$0xf]
    %v271 = vld [vmem:[#allocation7 + $0x30] sm:$0xf]
    %v272 = vld [vmem:[#allocation7 + $0x34] sm:$0xf]
    %v273 = vld [vmem:[#allocation7 + $0x38] sm:$0xf]
    %v274 = vld [vmem:[#allocation7 + $0x3c] sm:$0xf]
    %v275 = vld [vmem:[%s4] sm:$0x1]
    %v277 = vperm.slane %v275, 0
    %v295 = vunpack.c.l.b16 %v259
    %v296 = vunpack.c.l.b16 %v260
    %v297 = vunpack.c.l.b16 %v261
    %v298 = vunpack.c.l.b16 %v262
    %v299 = vunpack.c.l.b16 %v263
    %v300 = vunpack.c.l.b16 %v264
    %v301 = vunpack.c.l.b16 %v265
    %v302 = vunpack.c.l.b16 %v266
    %v303 = vunpack.c.l.b16 %v267
    %v304 = vunpack.c.l.b16 %v268
    %v305 = vunpack.c.l.b16 %v269
    %v306 = vunpack.c.l.b16 %v270
    %v307 = vunpack.c.l.b16 %v271
    %v308 = vunpack.c.l.b16 %v272
    %v309 = vunpack.c.l.b16 %v273
    %v310 = vunpack.c.l.b16 %v274
    %v311 = vpack.c.b16 %v296, %v295
    %v312 = vpack.c.b16 %v298, %v297
    %v313 = vpack.c.b16 %v300, %v299
    %v314 = vpack.c.b16 %v302, %v301
    %v315 = vpack.c.b16 %v304, %v303
    %v316 = vpack.c.b16 %v306, %v305
    %v317 = vpack.c.b16 %v308, %v307
    %v318 = vpack.c.b16 %v310, %v309
    %327 = vmatpush.bf16.msra.mxu0 %v318
    %328 = vmatpush.bf16.msra.mxu0 %v317
    %329 = vmatpush.bf16.msra.mxu0 %v316
    %330 = vmatpush.bf16.msra.mxu0 %v315
    %331 = vmatpush.bf16.msra.mxu0 %v314
    %332 = vmatpush.bf16.msra.mxu0 %v313
    %333 = vmatpush.bf16.msra.mxu0 %v312
    %334 = vmatpush.bf16.msra.mxu0 %v311
    %335 = vmatmul.bf16.gmra.mxu0 %v258
    %v336 = vpop.f32.mrf.mxu0
    %v337 = vadd.f32 %v277, %v336
    %v338 = vpop.f32.mrf.mxu0
    %v339 = vadd.f32 %v277, %v338
    %340 = vdwg.mxu0
    %v341 = vmax.f32 %v337, 0.0
    %v342 = vmax.f32 %v339, 0.0
    %v343 = vpack.c.bf16 %v342, %v341
    %v344 = vld [vmem:[#allocation8] sm:$0xf]
    %v345 = vld [vmem:[#allocation8 + $0x4] sm:$0xf]
    %v346 = vld [vmem:[#allocation8 + $0x8] sm:$0xf]
    %v347 = vld [vmem:[#allocation8 + $0xc] sm:$0xf]
    %v348 = vld [vmem:[#allocation8 + $0x10] sm:$0xf]
    %v349 = vld [vmem:[#allocation8 + $0x14] sm:$0xf]
    %v350 = vld [vmem:[#allocation8 + $0x18] sm:$0xf]
    %v351 = vld [vmem:[#allocation8 + $0x1c] sm:$0xf]
    %v352 = vld [vmem:[#allocation8 + $0x20] sm:$0xf]
    %v353 = vld [vmem:[#allocation8 + $0x24] sm:$0xf]
    %v354 = vld [vmem:[#allocation8 + $0x28] sm:$0xf]
    %v355 = vld [vmem:[#allocation8 + $0x2c] sm:$0xf]
    %v356 = vld [vmem:[#allocation8 + $0x30] sm:$0xf]
    %v357 = vld [vmem:[#allocation8 + $0x34] sm:$0xf]
    %v358 = vld [vmem:[#allocation8 + $0x38] sm:$0xf]
    %v359 = vld [vmem:[#allocation8 + $0x3c] sm:$0xf]
    %v360 = vld [vmem:[%s6] sm:$0x1]
    %v362 = vperm.slane %v360, 0
    %v380 = vunpack.c.l.b16 %v344
    %v381 = vunpack.c.l.b16 %v345
    %v382 = vunpack.c.l.b16 %v346
    %v383 = vunpack.c.l.b16 %v347
    %v384 = vunpack.c.l.b16 %v348
    %v385 = vunpack.c.l.b16 %v349
    %v386 = vunpack.c.l.b16 %v350
    %v387 = vunpack.c.l.b16 %v351
    %v388 = vunpack.c.l.b16 %v352
    %v389 = vunpack.c.l.b16 %v353
    %v390 = vunpack.c.l.b16 %v354
    %v391 = vunpack.c.l.b16 %v355
    %v392 = vunpack.c.l.b16 %v356
    %v393 = vunpack.c.l.b16 %v357
    %v394 = vunpack.c.l.b16 %v358
    %v395 = vunpack.c.l.b16 %v359
    %v396 = vpack.c.b16 %v381, %v380
    %v397 = vpack.c.b16 %v383, %v382
    %v398 = vpack.c.b16 %v385, %v384
    %v399 = vpack.c.b16 %v387, %v386
    %v400 = vpack.c.b16 %v389, %v388
    %v401 = vpack.c.b16 %v391, %v390
    %v402 = vpack.c.b16 %v393, %v392
    %v403 = vpack.c.b16 %v395, %v394
    %412 = vmatpush.bf16.msra.mxu0 %v403
    %413 = vmatpush.bf16.msra.mxu0 %v402
    %414 = vmatpush.bf16.msra.mxu0 %v401
    %415 = vmatpush.bf16.msra.mxu0 %v400
    %416 = vmatpush.bf16.msra.mxu0 %v399
    %417 = vmatpush.bf16.msra.mxu0 %v398
    %418 = vmatpush.bf16.msra.mxu0 %v397
    %419 = vmatpush.bf16.msra.mxu0 %v396
    %420 = vmatmul.bf16.gmra.mxu0 %v343
    %v421 = vpop.f32.mrf.mxu0
    %v422 = vadd.f32 %v362, %v421
    %v423 = vpop.f32.mrf.mxu0
    %v424 = vadd.f32 %v362, %v423
    %425 = vdwg.mxu0
    %v426 = vlaneseq
    %v427 = vand.u32 %v426, 127
    %vm428 = vcmp.lt.s32.totalorder %v427, 10
    %v429 = vsel %vm428, %v422, -inf
    %v430 = vsel %vm428, %v424, -inf
    %431 = vmax.xlane.f32.xlu0 %v429
    %v432 = vpop.xlane.xlu0 %431
    %433 = vmax.xlane.f32.xlu0 %v430
    %v434 = vpop.xlane.xlu0 %433
    %v435 = vsub.f32 %v429, %v432
    %v436 = vsub.f32 %v430, %v434
    %v437 = vmul.f32 %v435, 1.442695
    %v438 = vpow.pop %v437
    %v439 = vmul.f32 %v436, 1.442695
    %v440 = vpow.pop %v439
    %441 = vadd.xlane.f32.xlu0 %v438
    %v442 = vpop.xlane.xlu0 %441
    %443 = vadd.xlane.f32.xlu0 %v440
    %v444 = vpop.xlane.xlu0 %443
    %v445 = vlog2.pop %v442
    %v446 = vmul.f32 %v445, 0.6931472
    %v447 = vlog2.pop %v444
    %v448 = vmul.f32 %v447, 0.6931472
    %v449 = vsub.f32 %v435, %v446
    %v450 = vsub.f32 %v436, %v448
    %451 = vst [vmem:[#allocation10] sm:$0xff] %v449
    %452 = vst [vmem:[#allocation10 + $0x8] sm:$0xff] %v450
    // Predicated region
    $region46: #{tpu_custom_call.1} parent=1 // pred_check
      _
    $region47: #{tpu_custom_call.1} parent=1 // pred_check_branch
      %454 = sbr.rel (0) target = $region49
    $region48: #{tpu_custom_call.1} parent=1 // pred_region
      %456 = vsyncadd [#allocation4], 0
      %s457 = sshll.u32 [#allocation10], 4
      %s458 = int_to_ptr.vmem [resolvable:$true] %s457
      %s459 = sshll.u32 %s7, 4
      %s460 = int_to_ptr.hbm [resolvable:$true] %s459
      %465 = dma.vmem_to_hbm [thread:$0]  %s458, 256, %s460, [#allocation4], 128, 128, 8
    $region49: #{tpu_custom_call.1} parent=1 // pred_fallthru
      _
    // Predicated region
    $region50: #{tpu_custom_call.1} parent=1 // pred_check
      _
    $region51: #{tpu_custom_call.1} parent=1 // pred_check_branch
      %467 = sbr.rel (0) target = $region53
    $region52: #{tpu_custom_call.1} parent=1 // pred_region
      %469 = dma.done [#allocation4], 256
    $region53: #{tpu_custom_call.1} parent=1 // pred_fallthru
      _
    %470 = vsyncpa [#allocation3], 1
    %471 = vsyncpa [#allocation6], 1
    %472 = vsyncpa [#allocation9], 1
    %473 = vsyncpa [#allocation4], 1

</llo_original>
